<compile_context>
chip_gen: v7x
topology: tpu7x:2x2x1
jax: 0.10.0
libtpu: 0.0.40
codegen_flags: <defaults>
</compile_context>

<pallas_src>
import functools

import jax
import jax.numpy as jnp
from jax.experimental import pallas as pl
from jax.experimental.pallas import tpu as pltpu


def _relu6(x):
    return jnp.minimum(jnp.maximum(x, 0.0), 6.0)


def _round_up(n, m):
    return ((n + m - 1) // m) * m


def actor_critic_kernel(x_ref, w1_ref, b1_ref, w2_ref, b2_ref,
                        wh_ref, bh_ref, out_ref):
    # All operands f32 (exact module semantics); f32 accumulation on the MXU.
    x = x_ref[...]                                                     # (TB, S)
    h1 = _relu6(jnp.dot(x, w1_ref[...],
                        preferred_element_type=jnp.float32) + b1_ref[...])   # (TB, 64)
    h2 = _relu6(jnp.dot(h1, w2_ref[...],
                        preferred_element_type=jnp.float32) + b2_ref[...])   # (TB, 32)
    # Fused heads: columns [0:A] = mu, [A:A+1] = value, rest zero padding.
    out_ref[...] = (jnp.dot(h2, wh_ref[...],
                            preferred_element_type=jnp.float32)
                    + bh_ref[...])                                     # (TB, HW)


def prepare_params(params, action_var):
    """One-time parameter prep, hoisted out of the per-call path:
    fuse the mu/value heads into a single zero-padded (32, HW) weight / (1, HW)
    bias (HW = round_up(A+1, 8)) and build the constant covariance matrix."""
    w1, b1, w2, b2, wmu, bmu, wv, bv = params
    A = wmu.shape[1]
    hw = _round_up(A + 1, 8)                                           # narrow f32 head
    wh = jnp.concatenate([wmu, wv], axis=1)                            # (32, A+1)
    wh = jnp.pad(wh, ((0, 0), (0, hw - wh.shape[1])))                  # (32, HW)
    bh = jnp.concatenate([bmu, bv], axis=1)                            # (1, A+1)
    bh = jnp.pad(bh, ((0, 0), (0, hw - bh.shape[1])))                  # (1, HW)
    cov_mat = jnp.diag(action_var)                                     # (A, A)
    return (w1, b1, w2, b2, wh, bh, cov_mat)


def _pick_tile(B, tb):
    """Biggest row tile up to `tb`, but keep >= 2 grid steps for large batches
    so the 'parallel' axis can shard across both TensorCores on v7x."""
    bp8 = _round_up(max(B, 1), 8)
    TB = min(tb, bp8)
    if TB == bp8 and bp8 >= 256:
        TB = _round_up((bp8 + 1) // 2, 8)
    return TB


@functools.partial(jax.jit, static_argnames=("tb",))
def actor_critic_forward(x, prepped, *, tb=4096):
    """Fused MLP forward. Returns (mu, cov_mat, s_value) like the PyTorch module."""
    w1, b1, w2, b2, wh, bh, cov_mat = prepped
    B, S = x.shape
    A = cov_mat.shape[0]
    HW = wh.shape[1]

    TB = _pick_tile(B, tb)
    Bp = _round_up(B, TB)
    if Bp != B:
        x = jnp.pad(x, ((0, Bp - B), (0, 0)))
    grid = (Bp // TB,)

    def resident(shape):
        # Same block every grid step -> stays VMEM-resident, no re-DMA.
        return pl.BlockSpec(shape, lambda i: (0, 0))

    out = pl.pallas_call(
        actor_critic_kernel,
        grid=grid,
        in_specs=[
            pl.BlockSpec((TB, S), lambda i: (i, 0)),   # batch tile of x (f32)
            resident(w1.shape), resident(b1.shape),
            resident(w2.shape), resident(b2.shape),
            resident(wh.shape), resident(bh.shape),
        ],
        out_specs=pl.BlockSpec((TB, HW), lambda i: (i, 0)),
        out_shape=jax.ShapeDtypeStruct((Bp, HW), jnp.float32),
        compiler_params=pltpu.CompilerParams(
            dimension_semantics=("parallel",)),
    )(x, w1, b1, w2, b2, wh, bh)

    mu = out[:B, :A]
    s_value = out[:B, A:A + 1]
    return mu, cov_mat, s_value


def init_params(key, state_dim, action_dim):
    """Deterministic synthetic parameters. Shapes mirror the nn.Linear layers,
    stored as (in, out); biases stored as (1, out) for 2D TPU layout."""
    ks = jax.random.split(key, 8)
    w1 = jax.random.normal(ks[0], (state_dim, 64), jnp.float32) * 0.1
    b1 = jax.random.normal(ks[1], (1, 64), jnp.float32) * 0.1
    w2 = jax.random.normal(ks[2], (64, 32), jnp.float32) * 0.1
    b2 = jax.random.normal(ks[3], (1, 32), jnp.float32) * 0.1
    wmu = jax.random.normal(ks[4], (32, action_dim), jnp.float32) * 0.1
    bmu = jax.random.normal(ks[5], (1, action_dim), jnp.float32) * 0.1
    wv = jax.random.normal(ks[6], (32, 1), jnp.float32) * 0.1
    bv = jax.random.normal(ks[7], (1, 1), jnp.float32) * 0.1
    return (w1, b1, w2, b2, wmu, bmu, wv, bv)


def reference_forward_f32(x, params, action_var):
    """Pure f32 reference of the module semantics (highest-precision dots)."""
    w1, b1, w2, b2, wmu, bmu, wv, bv = params
    hp = jax.lax.Precision.HIGHEST
    h1 = _relu6(jnp.dot(x, w1, precision=hp) + b1)
    h2 = _relu6(jnp.dot(h1, w2, precision=hp) + b2)
    mu = jnp.dot(h2, wmu, precision=hp) + bmu
    s_value = jnp.dot(h2, wv, precision=hp) + bv
    return mu, jnp.diag(action_var), s_value


if __name__ == "__main__":
    batch = 8
    state_dim = 16
    action_dim = 4
    action_std = 0.5

    key = jax.random.PRNGKey(0)
    k_x, k_p, k_x2 = jax.random.split(key, 3)
    x = jax.random.normal(k_x, (batch, state_dim), jnp.float32)
    params = init_params(k_p, state_dim, action_dim)
    action_var = jnp.full((action_dim,), action_std * action_std, jnp.float32)

    prepped = prepare_params(params, action_var)

    # --- small-batch run (single grid step) ---
    mu, cov_mat, s_value = actor_critic_forward(x, prepped)
    jax.block_until_ready((mu, cov_mat, s_value))

    assert mu.shape == (batch, action_dim)
    assert cov_mat.shape == (action_dim, action_dim)
    assert s_value.shape == (batch, 1)

    mu_r, cov_r, val_r = reference_forward_f32(x, params, action_var)
    assert jnp.allclose(mu, mu_r, atol=2e-2), jnp.max(jnp.abs(mu - mu_r))
    assert jnp.allclose(s_value, val_r, atol=2e-2), jnp.max(jnp.abs(s_value - val_r))
    assert jnp.allclose(cov_mat, cov_r, atol=1e-6)

    # --- larger batch: exercises batch padding + a 2-step "parallel" grid ---
    batch2 = 600
    x2 = jax.random.normal(k_x2, (batch2, state_dim), jnp.float32)
    mu2, _, val2 = actor_critic_forward(x2, prepped)
    jax.block_until_ready((mu2, val2))
    mu2_r, _, val2_r = reference_forward_f32(x2, params, action_var)
    assert mu2.shape == (batch2, action_dim) and val2.shape == (batch2, 1)
    assert jnp.allclose(mu2, mu2_r, atol=2e-2)
    assert jnp.allclose(val2, val2_r, atol=2e-2)

    print("KERNEL_OK")
</pallas_src>

<mosaic_0001>
module attributes {stable_mosaic.version = 11 : i64} {
  func.func @actor_critic_kernel(%arg0: i32, %arg1: memref<8x16xf32, #tpu.memory_space<vmem>>, %arg2: memref<16x64xf32, #tpu.memory_space<vmem>>, %arg3: memref<1x64xf32, #tpu.memory_space<vmem>>, %arg4: memref<64x32xf32, #tpu.memory_space<vmem>>, %arg5: memref<1x32xf32, #tpu.memory_space<vmem>>, %arg6: memref<32x8xf32, #tpu.memory_space<vmem>>, %arg7: memref<1x8xf32, #tpu.memory_space<vmem>>, %arg8: memref<8x8xf32, #tpu.memory_space<vmem>>) attributes {dimension_semantics = [#tpu.dimension_semantics<parallel>], iteration_bounds = array<i64: 1>, scalar_prefetch = 0 : i64, scratch_operands = 0 : i64, tpu.core_type = #tpu.core_type<tc>, window_params = [{transform_indices = @transform_0, window_bounds = array<i64: 8, 16>}, {pipeline_mode = #tpu.pipeline_mode<synchronous>, transform_indices = @transform_1, window_bounds = array<i64: 16, 64>}, {pipeline_mode = #tpu.pipeline_mode<synchronous>, transform_indices = @transform_2, window_bounds = array<i64: 1, 64>}, {pipeline_mode = #tpu.pipeline_mode<synchronous>, transform_indices = @transform_3, window_bounds = array<i64: 64, 32>}, {pipeline_mode = #tpu.pipeline_mode<synchronous>, transform_indices = @transform_4, window_bounds = array<i64: 1, 32>}, {pipeline_mode = #tpu.pipeline_mode<synchronous>, transform_indices = @transform_5, window_bounds = array<i64: 32, 8>}, {pipeline_mode = #tpu.pipeline_mode<synchronous>, transform_indices = @transform_6, window_bounds = array<i64: 1, 8>}, {transform_indices = @transform_7, window_bounds = array<i64: 8, 8>}]} {
    %c0 = arith.constant 0 : index
    %c0_0 = arith.constant 0 : index
    %0 = vector.load %arg1[%c0, %c0_0] : memref<8x16xf32, #tpu.memory_space<vmem>>, vector<8x16xf32>
    %c0_1 = arith.constant 0 : index
    %c0_2 = arith.constant 0 : index
    %1 = vector.load %arg2[%c0_1, %c0_2] : memref<16x64xf32, #tpu.memory_space<vmem>>, vector<16x64xf32>
    %cst = arith.constant dense<0.000000e+00> : vector<8x64xf32>
    %2 = tpu.matmul %0, %1, %cst {dimension_numbers = #tpu.dot_dimension_numbers<[1], [0], [0], [1], [0, 0, 1, 1], [], []>} : vector<8x16xf32>, vector<16x64xf32>, vector<8x64xf32> -> vector<8x64xf32>
    %c0_3 = arith.constant 0 : index
    %c0_4 = arith.constant 0 : index
    %3 = vector.load %arg3[%c0_3, %c0_4] : memref<1x64xf32, #tpu.memory_space<vmem>>, vector<1x64xf32>
    %4 = vector.broadcast %3 : vector<1x64xf32> to vector<8x64xf32>
    %5 = arith.addf %2, %4 : vector<8x64xf32>
    %cst_5 = arith.constant 0.000000e+00 : f32
    %6 = vector.broadcast %cst_5 : f32 to vector<8x64xf32>
    %7 = arith.maximumf %5, %6 : vector<8x64xf32>
    %cst_6 = arith.constant 6.000000e+00 : f32
    %8 = vector.broadcast %cst_6 : f32 to vector<8x64xf32>
    %9 = arith.minimumf %7, %8 : vector<8x64xf32>
    %c0_7 = arith.constant 0 : index
    %c0_8 = arith.constant 0 : index
    %10 = vector.load %arg4[%c0_7, %c0_8] : memref<64x32xf32, #tpu.memory_space<vmem>>, vector<64x32xf32>
    %cst_9 = arith.constant dense<0.000000e+00> : vector<8x32xf32>
    %11 = tpu.matmul %9, %10, %cst_9 {dimension_numbers = #tpu.dot_dimension_numbers<[1], [0], [0], [1], [0, 0, 1, 1], [], []>} : vector<8x64xf32>, vector<64x32xf32>, vector<8x32xf32> -> vector<8x32xf32>
    %c0_10 = arith.constant 0 : index
    %c0_11 = arith.constant 0 : index
    %12 = vector.load %arg5[%c0_10, %c0_11] : memref<1x32xf32, #tpu.memory_space<vmem>>, vector<1x32xf32>
    %13 = vector.broadcast %12 : vector<1x32xf32> to vector<8x32xf32>
    %14 = arith.addf %11, %13 : vector<8x32xf32>
    %cst_12 = arith.constant 0.000000e+00 : f32
    %15 = vector.broadcast %cst_12 : f32 to vector<8x32xf32>
    %16 = arith.maximumf %14, %15 : vector<8x32xf32>
    %cst_13 = arith.constant 6.000000e+00 : f32
    %17 = vector.broadcast %cst_13 : f32 to vector<8x32xf32>
    %18 = arith.minimumf %16, %17 : vector<8x32xf32>
    %c0_14 = arith.constant 0 : index
    %c0_15 = arith.constant 0 : index
    %19 = vector.load %arg6[%c0_14, %c0_15] : memref<32x8xf32, #tpu.memory_space<vmem>>, vector<32x8xf32>
    %cst_16 = arith.constant dense<0.000000e+00> : vector<8x8xf32>
    %20 = tpu.matmul %18, %19, %cst_16 {dimension_numbers = #tpu.dot_dimension_numbers<[1], [0], [0], [1], [0, 0, 1, 1], [], []>} : vector<8x32xf32>, vector<32x8xf32>, vector<8x8xf32> -> vector<8x8xf32>
    %c0_17 = arith.constant 0 : index
    %c0_18 = arith.constant 0 : index
    %21 = vector.load %arg7[%c0_17, %c0_18] : memref<1x8xf32, #tpu.memory_space<vmem>>, vector<1x8xf32>
    %22 = vector.broadcast %21 : vector<1x8xf32> to vector<8x8xf32>
    %23 = arith.addf %20, %22 : vector<8x8xf32>
    %c0_19 = arith.constant 0 : index
    %c0_20 = arith.constant 0 : index
    %24 = vector.load %arg8[%c0_19, %c0_20] : memref<8x8xf32, #tpu.memory_space<vmem>>, vector<8x8xf32>
    tpu.vector_store %arg8[%c0_19, %c0_20], %23 {strides = array<i32>} : memref<8x8xf32, #tpu.memory_space<vmem>>, vector<8x8xf32>,
    return
  }
  func.func @transform_0(%arg0: i32) -> (i32, i32) {
    %c0_i32 = arith.constant 0 : i32
    %c0_i32_0 = arith.constant 0 : i32
    return %arg0, %c0_i32 : i32, i32
  }
  func.func @transform_1(%arg0: i32) -> (i32, i32) {
    %c0_i32 = arith.constant 0 : i32
    %c0_i32_0 = arith.constant 0 : i32
    %c0_i32_1 = arith.constant 0 : i32
    return %c0_i32, %c0_i32_0 : i32, i32
  }
  func.func @transform_2(%arg0: i32) -> (i32, i32) {
    %c0_i32 = arith.constant 0 : i32
    %c0_i32_0 = arith.constant 0 : i32
    %c0_i32_1 = arith.constant 0 : i32
    return %c0_i32, %c0_i32_0 : i32, i32
  }
  func.func @transform_3(%arg0: i32) -> (i32, i32) {
    %c0_i32 = arith.constant 0 : i32
    %c0_i32_0 = arith.constant 0 : i32
    %c0_i32_1 = arith.constant 0 : i32
    return %c0_i32, %c0_i32_0 : i32, i32
  }
  func.func @transform_4(%arg0: i32) -> (i32, i32) {
    %c0_i32 = arith.constant 0 : i32
    %c0_i32_0 = arith.constant 0 : i32
    %c0_i32_1 = arith.constant 0 : i32
    return %c0_i32, %c0_i32_0 : i32, i32
  }
  func.func @transform_5(%arg0: i32) -> (i32, i32) {
    %c0_i32 = arith.constant 0 : i32
    %c0_i32_0 = arith.constant 0 : i32
    %c0_i32_1 = arith.constant 0 : i32
    return %c0_i32, %c0_i32_0 : i32, i32
  }
  func.func @transform_6(%arg0: i32) -> (i32, i32) {
    %c0_i32 = arith.constant 0 : i32
    %c0_i32_0 = arith.constant 0 : i32
    %c0_i32_1 = arith.constant 0 : i32
    return %c0_i32, %c0_i32_0 : i32, i32
  }
  func.func @transform_7(%arg0: i32) -> (i32, i32) {
    %c0_i32 = arith.constant 0 : i32
    %c0_i32_0 = arith.constant 0 : i32
    return %arg0, %c0_i32 : i32, i32
  }
}

</mosaic_0001>

<llo_original>
// kernel: actor_critic_forward.1
$region0: #{actor_critic_forward.1}
  #allocation0 [shape = 'u32[]', space=smem, size = 0x4, offset = 0x4, fixed_abs, tag = 'smem constant byte address 0x4 - core index']
  #allocation1 [shape = 'u32[144,128]{1,0:T(1,128)}', space=vmem, size = 0x12000, scoped, tag = 'internal scratch']
  %s0 = inlined_call_operand.vmem [shape: f32[8,16], index: 0, kind: input, shape index: {}]
  %s1 = inlined_call_operand.vmem [shape: f32[16,64], index: 1, kind: input, shape index: {}]
  %s2 = inlined_call_operand.vmem [shape: f32[1,64], index: 2, kind: input, shape index: {}]
  %s3 = inlined_call_operand.vmem [shape: f32[64,32], index: 3, kind: input, shape index: {}]
  %s4 = inlined_call_operand.vmem [shape: f32[1,32], index: 4, kind: input, shape index: {}]
  %s5 = inlined_call_operand.vmem [shape: f32[32,8], index: 5, kind: input, shape index: {}]
  %s6 = inlined_call_operand.vmem [shape: f32[1,8], index: 6, kind: input, shape index: {}]
  %s7 = inlined_call_operand.vmem [shape: f32[8,8], index: 7, kind: output, shape index: {}]
  %s8 = sld [smem:[#allocation0]]
  $region38: #{actor_critic_forward.1} parent=0
    _
  %s10 = ssub.s32 1, %s8
  %s11 = scalar_select 0, %s10, %s8
  // Predicated region
  $region2: #{actor_critic_forward.1} parent=0 // pred_check
    _
  $region3: #{actor_critic_forward.1} parent=0 // pred_check_branch
    %13 = sbr.rel (0) target = $region5
  $region4: #{actor_critic_forward.1} parent=0 // pred_region
    _
  $region5: #{actor_critic_forward.1} parent=0 // pred_fallthru
    _
  // Predicated region
  $region6: #{actor_critic_forward.1} parent=0 // pred_check
    _
  $region7: #{actor_critic_forward.1} parent=0 // pred_check_branch
    %15 = sbr.rel (0) target = $region9
  $region8: #{actor_critic_forward.1} parent=0 // pred_region
    _
  $region9: #{actor_critic_forward.1} parent=0 // pred_fallthru
    _
  // Predicated region
  $region10: #{actor_critic_forward.1} parent=0 // pred_check
    _
  $region11: #{actor_critic_forward.1} parent=0 // pred_check_branch
    %17 = sbr.rel (0) target = $region13
  $region12: #{actor_critic_forward.1} parent=0 // pred_region
    _
  $region13: #{actor_critic_forward.1} parent=0 // pred_fallthru
    _
  // Predicated region
  $region14: #{actor_critic_forward.1} parent=0 // pred_check
    _
  $region15: #{actor_critic_forward.1} parent=0 // pred_check_branch
    %19 = sbr.rel (0) target = $region17
  $region16: #{actor_critic_forward.1} parent=0 // pred_region
    _
  $region17: #{actor_critic_forward.1} parent=0 // pred_fallthru
    _
  // Predicated region
  $region18: #{actor_critic_forward.1} parent=0 // pred_check
    _
  $region19: #{actor_critic_forward.1} parent=0 // pred_check_branch
    %21 = sbr.rel (0) target = $region21
  $region20: #{actor_critic_forward.1} parent=0 // pred_region
    _
  $region21: #{actor_critic_forward.1} parent=0 // pred_fallthru
    _
  // Predicated region
  $region22: #{actor_critic_forward.1} parent=0 // pred_check
    _
  $region23: #{actor_critic_forward.1} parent=0 // pred_check_branch
    %23 = sbr.rel (0) target = $region25
  $region24: #{actor_critic_forward.1} parent=0 // pred_region
    _
  $region25: #{actor_critic_forward.1} parent=0 // pred_fallthru
    _
  // Predicated region
  $region26: #{actor_critic_forward.1} parent=0 // pred_check
    _
  $region27: #{actor_critic_forward.1} parent=0 // pred_check_branch
    %25 = sbr.rel (0) target = $region29
  $region28: #{actor_critic_forward.1} parent=0 // pred_region
    _
  $region29: #{actor_critic_forward.1} parent=0 // pred_fallthru
    _
  %v26 = vld [vmem:[%s0] sm:$0xff]
  %v27 = vld [vmem:[%s1] sm:$0xff]
  %v28 = vld [vmem:[%s1 + $0x8] sm:$0xff]
  %v29 = vld [vmem:[%s2] sm:$0x1]
  %v31 = vlaneseq
  %v32 = vshrl.u32 %v31, 7
  %v33 = vsub.s32 0, %v32
  %v34 = vrot.slane %v29, %v33
  %vm36 = vcmask 130048
  %v38 = vsel %vm36, %v26, 0
  %40 = vmatprep.subr.mxu0 0.0
  %41 = vmatpush1.msra.mxu0 %v27
  %42 = vmatprep.subr.mxu0 0.0
  %43 = vmatpush1.msra.mxu0 %v28
  %44 = vmatprep.subr.mxu0 0.0
  %45 = vmatpush1.msra.mxu0 0.0
  %46 = vmatprep.subr.mxu0 0.0
  %47 = vmatpush1.msra.mxu0 0.0
  %48 = vmatprep.subr.mxu0 0.0
  %49 = vmatpush1.msra.mxu0 0.0
  %50 = vmatprep.subr.mxu0 0.0
  %51 = vmatpush1.msra.mxu0 0.0
  %52 = vmatprep.subr.mxu0 0.0
  %53 = vmatpush1.msra.mxu0 0.0
  %54 = vmatprep.subr.mxu0 0.0
  %55 = vmatpush1.msra.mxu0 0.0
  %56 = vmatprep.subr.mxu0 0.0
  %57 = vmatpush1.msra.mxu0 0.0
  %58 = vmatprep.subr.mxu0 0.0
  %59 = vmatpush1.msra.mxu0 0.0
  %60 = vmatprep.subr.mxu0 0.0
  %61 = vmatpush1.msra.mxu0 0.0
  %62 = vmatprep.subr.mxu0 0.0
  %63 = vmatpush1.msra.mxu0 0.0
  %64 = vmatprep.subr.mxu0 0.0
  %65 = vmatpush1.msra.mxu0 0.0
  %66 = vmatprep.subr.mxu0 0.0
  %67 = vmatpush1.msra.mxu0 0.0
  %68 = vmatprep.subr.mxu0 0.0
  %69 = vmatpush1.msra.mxu0 0.0
  %70 = vmatprep.subr.mxu0 0.0
  %71 = vmatpush1.msra.mxu0 0.0
  %72 = vmatprep.subr.mxu0 0.0
  %73 = vmatpush1.msra.mxu0 0.0
  %74 = vmatprep.subr.mxu0 0.0
  %75 = vmatpush1.msra.mxu0 0.0
  %76 = vmatprep.subr.mxu0 0.0
  %77 = vmatpush1.msra.mxu0 0.0
  %78 = vmatprep.subr.mxu0 0.0
  %79 = vmatpush1.msra.mxu0 0.0
  %80 = vmatprep.subr.mxu0 0.0
  %81 = vmatpush1.msra.mxu0 0.0
  %82 = vmatprep.subr.mxu0 0.0
  %83 = vmatpush1.msra.mxu0 0.0
  %84 = vmatprep.subr.mxu0 0.0
  %85 = vmatpush1.msra.mxu0 0.0
  %86 = vmatprep.subr.mxu0 0.0
  %87 = vmatpush1.msra.mxu0 0.0
  %88 = vmatprep.subr.mxu0 0.0
  %89 = vmatpush1.msra.mxu0 0.0
  %90 = vmatprep.subr.mxu0 0.0
  %91 = vmatpush1.msra.mxu0 0.0
  %92 = vmatprep.subr.mxu0 0.0
  %93 = vmatpush1.msra.mxu0 0.0
  %94 = vmatprep.subr.mxu0 0.0
  %95 = vmatpush1.msra.mxu0 0.0
  %96 = vmatprep.subr.mxu0 0.0
  %97 = vmatpush1.msra.mxu0 0.0
  %98 = vmatprep.subr.mxu0 0.0
  %99 = vmatpush1.msra.mxu0 0.0
  %100 = vmatprep.subr.mxu0 0.0
  %101 = vmatpush1.msra.mxu0 0.0
  %102 = vmatprep.subr.mxu0 0.0
  %103 = vmatpush1.msra.mxu0 0.0
  %104 = vmatprep.mubr.f32.mxu0 0.0
  %105 = vmatmul.mubr.f32.gmra.mrb[0].mxu0 %v38
  %v106 = vpop.f32.mrb[0].mxu0
  %v107 = vadd.f32 %v34, %v106
  %v108 = vpop.f32.mrb[0].mxu0
  %109 = vdwg.mxu0
  %v110 = vmax.f32 %v107, 0.0
  %v111 = vmin.f32 %v110, 6.0
  %v112 = vld [vmem:[%s3] sm:$0xff]
  %v113 = vld [vmem:[%s3 + $0x8] sm:$0xff]
  %v114 = vld [vmem:[%s3 + $0x10] sm:$0xff]
  %v115 = vld [vmem:[%s3 + $0x18] sm:$0xff]
  %v116 = vld [vmem:[%s3 + $0x20] sm:$0xff]
  %v117 = vld [vmem:[%s3 + $0x28] sm:$0xff]
  %v118 = vld [vmem:[%s3 + $0x30] sm:$0xff]
  %v119 = vld [vmem:[%s3 + $0x38] sm:$0xff]
  %v120 = vld [vmem:[%s4] sm:$0x1]
  %v122 = vlaneseq
  %v123 = vshrl.u32 %v122, 7
  %v124 = vsub.s32 0, %v123
  %v125 = vrot.slane %v120, %v124
  %vm127 = vcmask 523264
  %v129 = vsel %vm127, %v111, 0
  %131 = vmatprep.subr.mxu0 0.0
  %132 = vmatpush1.msra.mxu0 %v112
  %133 = vmatprep.subr.mxu0 0.0
  %134 = vmatpush1.msra.mxu0 %v113
  %135 = vmatprep.subr.mxu0 0.0
  %136 = vmatpush1.msra.mxu0 %v114
  %137 = vmatprep.subr.mxu0 0.0
  %138 = vmatpush1.msra.mxu0 %v115
  %139 = vmatprep.subr.mxu0 0.0
  %140 = vmatpush1.msra.mxu0 %v116
  %141 = vmatprep.subr.mxu0 0.0
  %142 = vmatpush1.msra.mxu0 %v117
  %143 = vmatprep.subr.mxu0 0.0
  %144 = vmatpush1.msra.mxu0 %v118
  %145 = vmatprep.subr.mxu0 0.0
  %146 = vmatpush1.msra.mxu0 %v119
  %147 = vmatprep.subr.mxu0 0.0
  %148 = vmatpush1.msra.mxu0 0.0
  %149 = vmatprep.subr.mxu0 0.0
  %150 = vmatpush1.msra.mxu0 0.0
  %151 = vmatprep.subr.mxu0 0.0
  %152 = vmatpush1.msra.mxu0 0.0
  %153 = vmatprep.subr.mxu0 0.0
  %154 = vmatpush1.msra.mxu0 0.0
  %155 = vmatprep.subr.mxu0 0.0
  %156 = vmatpush1.msra.mxu0 0.0
  %157 = vmatprep.subr.mxu0 0.0
  %158 = vmatpush1.msra.mxu0 0.0
  %159 = vmatprep.subr.mxu0 0.0
  %160 = vmatpush1.msra.mxu0 0.0
  %161 = vmatprep.subr.mxu0 0.0
  %162 = vmatpush1.msra.mxu0 0.0
  %163 = vmatprep.subr.mxu0 0.0
  %164 = vmatpush1.msra.mxu0 0.0
  %165 = vmatprep.subr.mxu0 0.0
  %166 = vmatpush1.msra.mxu0 0.0
  %167 = vmatprep.subr.mxu0 0.0
  %168 = vmatpush1.msra.mxu0 0.0
  %169 = vmatprep.subr.mxu0 0.0
  %170 = vmatpush1.msra.mxu0 0.0
  %171 = vmatprep.subr.mxu0 0.0
  %172 = vmatpush1.msra.mxu0 0.0
  %173 = vmatprep.subr.mxu0 0.0
  %174 = vmatpush1.msra.mxu0 0.0
  %175 = vmatprep.subr.mxu0 0.0
  %176 = vmatpush1.msra.mxu0 0.0
  %177 = vmatprep.subr.mxu0 0.0
  %178 = vmatpush1.msra.mxu0 0.0
  %179 = vmatprep.subr.mxu0 0.0
  %180 = vmatpush1.msra.mxu0 0.0
  %181 = vmatprep.subr.mxu0 0.0
  %182 = vmatpush1.msra.mxu0 0.0
  %183 = vmatprep.subr.mxu0 0.0
  %184 = vmatpush1.msra.mxu0 0.0
  %185 = vmatprep.subr.mxu0 0.0
  %186 = vmatpush1.msra.mxu0 0.0
  %187 = vmatprep.subr.mxu0 0.0
  %188 = vmatpush1.msra.mxu0 0.0
  %189 = vmatprep.subr.mxu0 0.0
  %190 = vmatpush1.msra.mxu0 0.0
  %191 = vmatprep.subr.mxu0 0.0
  %192 = vmatpush1.msra.mxu0 0.0
  %193 = vmatprep.subr.mxu0 0.0
  %194 = vmatpush1.msra.mxu0 0.0
  %195 = vmatprep.mubr.f32.mxu0 0.0
  %196 = vmatmul.mubr.f32.gmra.mrb[0].mxu0 %v129
  %v197 = vpop.f32.mrb[0].mxu0
  %v198 = vadd.f32 %v125, %v197
  %v199 = vpop.f32.mrb[0].mxu0
  %200 = vdwg.mxu0
  %v201 = vmax.f32 %v198, 0.0
  %v202 = vmin.f32 %v201, 6.0
  %v203 = vld [vmem:[%s5] sm:$0xff]
  %v204 = vld [vmem:[%s5 + $0x8] sm:$0xff]
  %v205 = vld [vmem:[%s5 + $0x10] sm:$0xff]
  %v206 = vld [vmem:[%s5 + $0x18] sm:$0xff]
  %v207 = vld [vmem:[%s6] sm:$0x1]
  %v209 = vlaneseq
  %v210 = vshrl.u32 %v209, 7
  %v211 = vsub.s32 0, %v210
  %v212 = vrot.slane %v207, %v211
  %vm214 = vcmask 261120
  %v216 = vsel %vm214, %v202, 0
  %218 = vmatprep.subr.mxu0 0.0
  %219 = vmatpush1.msra.mxu0 %v203
  %220 = vmatprep.subr.mxu0 0.0
  %221 = vmatpush1.msra.mxu0 %v204
  %222 = vmatprep.subr.mxu0 0.0
  %223 = vmatpush1.msra.mxu0 %v205
  %224 = vmatprep.subr.mxu0 0.0
  %225 = vmatpush1.msra.mxu0 %v206
  %226 = vmatprep.subr.mxu0 0.0
  %227 = vmatpush1.msra.mxu0 0.0
  %228 = vmatprep.subr.mxu0 0.0
  %229 = vmatpush1.msra.mxu0 0.0
  %230 = vmatprep.subr.mxu0 0.0
  %231 = vmatpush1.msra.mxu0 0.0
  %232 = vmatprep.subr.mxu0 0.0
  %233 = vmatpush1.msra.mxu0 0.0
  %234 = vmatprep.subr.mxu0 0.0
  %235 = vmatpush1.msra.mxu0 0.0
  %236 = vmatprep.subr.mxu0 0.0
  %237 = vmatpush1.msra.mxu0 0.0
  %238 = vmatprep.subr.mxu0 0.0
  %239 = vmatpush1.msra.mxu0 0.0
  %240 = vmatprep.subr.mxu0 0.0
  %241 = vmatpush1.msra.mxu0 0.0
  %242 = vmatprep.subr.mxu0 0.0
  %243 = vmatpush1.msra.mxu0 0.0
  %244 = vmatprep.subr.mxu0 0.0
  %245 = vmatpush1.msra.mxu0 0.0
  %246 = vmatprep.subr.mxu0 0.0
  %247 = vmatpush1.msra.mxu0 0.0
  %248 = vmatprep.subr.mxu0 0.0
  %249 = vmatpush1.msra.mxu0 0.0
  %250 = vmatprep.subr.mxu0 0.0
  %251 = vmatpush1.msra.mxu0 0.0
  %252 = vmatprep.subr.mxu0 0.0
  %253 = vmatpush1.msra.mxu0 0.0
  %254 = vmatprep.subr.mxu0 0.0
  %255 = vmatpush1.msra.mxu0 0.0
  %256 = vmatprep.subr.mxu0 0.0
  %257 = vmatpush1.msra.mxu0 0.0
  %258 = vmatprep.subr.mxu0 0.0
  %259 = vmatpush1.msra.mxu0 0.0
  %260 = vmatprep.subr.mxu0 0.0
  %261 = vmatpush1.msra.mxu0 0.0
  %262 = vmatprep.subr.mxu0 0.0
  %263 = vmatpush1.msra.mxu0 0.0
  %264 = vmatprep.subr.mxu0 0.0
  %265 = vmatpush1.msra.mxu0 0.0
  %266 = vmatprep.subr.mxu0 0.0
  %267 = vmatpush1.msra.mxu0 0.0
  %268 = vmatprep.subr.mxu0 0.0
  %269 = vmatpush1.msra.mxu0 0.0
  %270 = vmatprep.subr.mxu0 0.0
  %271 = vmatpush1.msra.mxu0 0.0
  %272 = vmatprep.subr.mxu0 0.0
  %273 = vmatpush1.msra.mxu0 0.0
  %274 = vmatprep.subr.mxu0 0.0
  %275 = vmatpush1.msra.mxu0 0.0
  %276 = vmatprep.subr.mxu0 0.0
  %277 = vmatpush1.msra.mxu0 0.0
  %278 = vmatprep.subr.mxu0 0.0
  %279 = vmatpush1.msra.mxu0 0.0
  %280 = vmatprep.subr.mxu0 0.0
  %281 = vmatpush1.msra.mxu0 0.0
  %282 = vmatprep.mubr.f32.mxu0 0.0
  %283 = vmatmul.mubr.f32.gmra.mrb[0].mxu0 %v216
  %v284 = vpop.f32.mrb[0].mxu0
  %v285 = vadd.f32 %v212, %v284
  %v286 = vpop.f32.mrb[0].mxu0
  %287 = vdwg.mxu0
  %vm288 = vcmask 64512
  %289 = vst.msk [vmem:[%s7] sm:$0xff] %vm288, %v285
  // Predicated region
  $region30: #{actor_critic_forward.1} parent=0 // pred_check
    _
  $region31: #{actor_critic_forward.1} parent=0 // pred_check_branch
    %291 = sbr.rel (0) target = $region33
  $region32: #{actor_critic_forward.1} parent=0 // pred_region
    _
  $region33: #{actor_critic_forward.1} parent=0 // pred_fallthru
    _
  // Predicated region
  $region34: #{actor_critic_forward.1} parent=0 // pred_check
    _
  $region35: #{actor_critic_forward.1} parent=0 // pred_check_branch
    %293 = sbr.rel (0) target = $region37
  $region36: #{actor_critic_forward.1} parent=0 // pred_region
    _
  $region37: #{actor_critic_forward.1} parent=0 // pred_fallthru
    _

</llo_original>
